<compile_context>
chip_gen: v7x
topology: tpu7x:2x2x1
jax: 0.10.0
libtpu: 0.0.40
codegen_flags: <defaults>
</compile_context>

<pallas_src>
import math

import jax
import jax.numpy as jnp
from jax.experimental import pallas as pl
from jax.experimental.pallas import tpu as pltpu


def _round_up(x, m):
    return ((x + m - 1) // m) * m


def _pick_batch_tile(B):
    """Batch tile size (rows of x per grid step)."""
    if B <= 128:
        # Single full-extent block: block dims == array dims (always legal).
        return B
    TB = min(8192, _round_up(B, 128))
    # Keep >=2 grid steps so a dual-TensorCore chip (v7x) can split the batch
    # axis; VMEM is not the constraint (the tile is ~1 MiB).
    TB = min(TB, _round_up((B + 1) // 2, 128))
    return TB


def _novelty_kernel(x_ref, mean_ref, inv_std_ref, w_ref, b_ref, o_ref):
    x = x_ref[...]                                            # (TB, N) native layout
    # normalized = (x - mean) * (1/std); std==0 -> inf; (x==mean)*inf -> NaN
    normalized = (x - mean_ref[...]) * inv_std_ref[...]       # (1, N) broadcast
    # normalized[isnan(normalized)] = 0
    normalized = jnp.where(jnp.isnan(normalized), 0.0, normalized)
    # y[o, b] = sum_n W[o, n] * normalized[b, n]  -> (8, TB) lane-dense result
    y = jax.lax.dot_general(
        w_ref[...], normalized,
        dimension_numbers=(((1,), (1,)), ((), ())),
        preferred_element_type=jnp.float32)
    o_ref[...] = y + b_ref[...]                               # bias (8, 1) broadcast


def novelty_type_classifier_forward(x, mean, std, weight, bias):
    """x: (B, N) f32; mean/std: (N,); weight: (6, N) torch layout; bias: (6,)."""
    B, N = x.shape
    n_out = weight.shape[0]                                   # 6
    n_out_pad = 8                                             # pad to 8 sublanes

    TB = _pick_batch_tile(B)
    grid = (pl.cdiv(B, TB),)                                  # boundary block masked by Pallas

    x_f = x.astype(jnp.float32)                               # native layout, no copy pass
    mean_r = mean.reshape(1, N).astype(jnp.float32)
    inv_std_r = (1.0 / std.astype(jnp.float32)).reshape(1, N)  # exact reciprocal
    w_pad = jnp.zeros((n_out_pad, N), jnp.float32).at[:n_out].set(weight.astype(jnp.float32))
    b_pad = jnp.zeros((n_out_pad, 1), jnp.float32).at[:n_out, 0].set(bias.astype(jnp.float32))

    out_t = pl.pallas_call(
        _novelty_kernel,
        out_shape=jax.ShapeDtypeStruct((n_out_pad, B), jnp.float32),
        grid_spec=pltpu.PrefetchScalarGridSpec(
            num_scalar_prefetch=0,
            grid=grid,
            in_specs=[
                pl.BlockSpec((TB, N), lambda i: (i, 0)),         # x tile, native (B, N)
                pl.BlockSpec((1, N), lambda i: (0, 0)),          # mean (resident)
                pl.BlockSpec((1, N), lambda i: (0, 0)),          # 1/std (resident)
                pl.BlockSpec((n_out_pad, N), lambda i: (0, 0)),  # W padded (resident)
                pl.BlockSpec((n_out_pad, 1), lambda i: (0, 0)),  # bias padded (resident)
            ],
            out_specs=pl.BlockSpec((n_out_pad, TB), lambda i: (0, i)),  # lane-dense output
        ),
        # "parallel" is safe on every generation; on v7x, pltpu.CORE_PARALLEL on
        # this axis would explicitly shard the >=2 grid steps across both TCs
        # (kept portable here since the kernel is HBM-bound anyway).
        compiler_params=pltpu.CompilerParams(
            dimension_semantics=("parallel",)),
        cost_estimate=pl.CostEstimate(
            flops=2 * B * N * n_out_pad + 3 * B * N,
            transcendentals=0,
            bytes_accessed=4 * (B * N + n_out_pad * B + n_out_pad * N
                                + 2 * N + n_out_pad)),
    )(x_f, mean_r, inv_std_r, w_pad, b_pad)

    # Only the tiny (6, B) result is transposed back to torch layout (B, 6).
    return out_t[:n_out, :].T


def _reference(x, mean, std, weight, bias):
    normalized = (x - mean[None, :]) / std[None, :]
    normalized = jnp.where(jnp.isnan(normalized), 0.0, normalized)
    return normalized @ weight.T + bias[None, :]


if __name__ == "__main__":
    key = jax.random.PRNGKey(0)
    N = 32              # n_signals
    N_OUT = 6

    k_x, k_w, k_b, k_m, k_s, k_x2 = jax.random.split(key, 6)

    # Deterministic parameter init (torch.nn.Linear default: U(-1/sqrt(N), 1/sqrt(N))).
    bound = 1.0 / math.sqrt(N)
    weight = jax.random.uniform(k_w, (N_OUT, N), jnp.float32, -bound, bound)
    bias = jax.random.uniform(k_b, (N_OUT,), jnp.float32, -bound, bound)

    # mean / std parameters; one std set to 0 to exercise the NaN-rescue path.
    mean = jax.random.normal(k_m, (N,), jnp.float32) * 0.1
    std = jnp.abs(jax.random.normal(k_s, (N,), jnp.float32)) + 0.5
    std = std.at[3].set(0.0)

    # Small case (B < 128 -> single full-extent block).
    B = 8
    x = jax.random.normal(k_x, (B, N), jnp.float32)
    x = x.at[0, 3].set(mean[3])   # -> 0/0 (== 0*inf) = NaN, zeroed by the kernel

    out = novelty_type_classifier_forward(x, mean, std, weight, bias)
    out = jax.block_until_ready(out)
    ref = _reference(x, mean, std, weight, bias)
    assert out.shape == (B, N_OUT)
    assert jnp.allclose(out, ref, atol=1e-4, rtol=1e-4), (out, ref)

    # Multi-tile case (grid of 2, non-divisible boundary block is masked).
    B2 = 300
    x2 = jax.random.normal(k_x2, (B2, N), jnp.float32)
    x2 = x2.at[:, 3].set(mean[3])  # whole zero-std column -> NaN -> 0 (all finite)
    out2 = novelty_type_classifier_forward(x2, mean, std, weight, bias)
    out2 = jax.block_until_ready(out2)
    ref2 = _reference(x2, mean, std, weight, bias)
    assert out2.shape == (B2, N_OUT)
    assert jnp.allclose(out2, ref2, atol=1e-4, rtol=1e-4), (out2, ref2)

    print("KERNEL_OK")
</pallas_src>

<mosaic_0001>
module attributes {stable_mosaic.version = 11 : i64} {
  func.func @_novelty_kernel(%arg0: i32, %arg1: memref<8x32xf32, #tpu.memory_space<vmem>>, %arg2: memref<1x32xf32, #tpu.memory_space<vmem>>, %arg3: memref<1x32xf32, #tpu.memory_space<vmem>>, %arg4: memref<8x32xf32, #tpu.memory_space<vmem>>, %arg5: memref<8x1xf32, #tpu.memory_space<vmem>>, %arg6: memref<8x8xf32, #tpu.memory_space<vmem>>) attributes {dimension_semantics = [#tpu.dimension_semantics<parallel>], iteration_bounds = array<i64: 1>, scalar_prefetch = 0 : i64, scratch_operands = 0 : i64, tpu.core_type = #tpu.core_type<tc>, window_params = [{transform_indices = @transform_0, window_bounds = array<i64: 8, 32>}, {pipeline_mode = #tpu.pipeline_mode<synchronous>, transform_indices = @transform_1, window_bounds = array<i64: 1, 32>}, {pipeline_mode = #tpu.pipeline_mode<synchronous>, transform_indices = @transform_2, window_bounds = array<i64: 1, 32>}, {pipeline_mode = #tpu.pipeline_mode<synchronous>, transform_indices = @transform_3, window_bounds = array<i64: 8, 32>}, {pipeline_mode = #tpu.pipeline_mode<synchronous>, transform_indices = @transform_4, window_bounds = array<i64: 8, 1>}, {transform_indices = @transform_5, window_bounds = array<i64: 8, 8>}]} {
    %c0 = arith.constant 0 : index
    %c0_0 = arith.constant 0 : index
    %0 = vector.load %arg1[%c0, %c0_0] : memref<8x32xf32, #tpu.memory_space<vmem>>, vector<8x32xf32>
    %c0_1 = arith.constant 0 : index
    %c0_2 = arith.constant 0 : index
    %1 = vector.load %arg2[%c0_1, %c0_2] : memref<1x32xf32, #tpu.memory_space<vmem>>, vector<1x32xf32>
    %2 = vector.broadcast %1 : vector<1x32xf32> to vector<8x32xf32>
    %3 = arith.subf %0, %2 : vector<8x32xf32>
    %c0_3 = arith.constant 0 : index
    %c0_4 = arith.constant 0 : index
    %4 = vector.load %arg3[%c0_3, %c0_4] : memref<1x32xf32, #tpu.memory_space<vmem>>, vector<1x32xf32>
    %5 = vector.broadcast %4 : vector<1x32xf32> to vector<8x32xf32>
    %6 = arith.mulf %3, %5 : vector<8x32xf32>
    %7 = arith.cmpf one, %6, %6 : vector<8x32xf32>
    %cst = arith.constant 0.000000e+00 : f32
    %8 = vector.broadcast %cst : f32 to vector<8x32xf32>
    %9 = arith.select %7, %8, %6 : vector<8x32xi1>, vector<8x32xf32>
    %c0_5 = arith.constant 0 : index
    %c0_6 = arith.constant 0 : index
    %10 = vector.load %arg4[%c0_5, %c0_6] : memref<8x32xf32, #tpu.memory_space<vmem>>, vector<8x32xf32>
    %cst_7 = arith.constant dense<0.000000e+00> : vector<8x8xf32>
    %11 = tpu.matmul %10, %9, %cst_7 {dimension_numbers = #tpu.dot_dimension_numbers<[1], [1], [0], [0], [0, 0, 1, 0], [], []>} : vector<8x32xf32>, vector<8x32xf32>, vector<8x8xf32> -> vector<8x8xf32>
    %c0_8 = arith.constant 0 : index
    %c0_9 = arith.constant 0 : index
    %12 = vector.load %arg5[%c0_8, %c0_9] : memref<8x1xf32, #tpu.memory_space<vmem>>, vector<8x1xf32>
    %13 = vector.broadcast %12 : vector<8x1xf32> to vector<8x8xf32>
    %14 = arith.addf %11, %13 : vector<8x8xf32>
    %c0_10 = arith.constant 0 : index
    %c0_11 = arith.constant 0 : index
    %15 = vector.load %arg6[%c0_10, %c0_11] : memref<8x8xf32, #tpu.memory_space<vmem>>, vector<8x8xf32>
    tpu.vector_store %arg6[%c0_10, %c0_11], %14 {strides = array<i32>} : memref<8x8xf32, #tpu.memory_space<vmem>>, vector<8x8xf32>,
    return
  }
  func.func @transform_0(%arg0: i32) -> (i32, i32) {
    %c0_i32 = arith.constant 0 : i32
    %c0_i32_0 = arith.constant 0 : i32
    return %arg0, %c0_i32 : i32, i32
  }
  func.func @transform_1(%arg0: i32) -> (i32, i32) {
    %c0_i32 = arith.constant 0 : i32
    %c0_i32_0 = arith.constant 0 : i32
    %c0_i32_1 = arith.constant 0 : i32
    return %c0_i32, %c0_i32_0 : i32, i32
  }
  func.func @transform_2(%arg0: i32) -> (i32, i32) {
    %c0_i32 = arith.constant 0 : i32
    %c0_i32_0 = arith.constant 0 : i32
    %c0_i32_1 = arith.constant 0 : i32
    return %c0_i32, %c0_i32_0 : i32, i32
  }
  func.func @transform_3(%arg0: i32) -> (i32, i32) {
    %c0_i32 = arith.constant 0 : i32
    %c0_i32_0 = arith.constant 0 : i32
    %c0_i32_1 = arith.constant 0 : i32
    return %c0_i32, %c0_i32_0 : i32, i32
  }
  func.func @transform_4(%arg0: i32) -> (i32, i32) {
    %c0_i32 = arith.constant 0 : i32
    %c0_i32_0 = arith.constant 0 : i32
    %c0_i32_1 = arith.constant 0 : i32
    return %c0_i32, %c0_i32_0 : i32, i32
  }
  func.func @transform_5(%arg0: i32) -> (i32, i32) {
    %c0_i32 = arith.constant 0 : i32
    %c0_i32_0 = arith.constant 0 : i32
    return %c0_i32, %arg0 : i32, i32
  }
}

</mosaic_0001>

<llo_original>
// kernel: tpu_custom_call.1
$region0: #{tpu_custom_call.1}
  #allocation0 [shape = 'u32[]', space=smem, size = 0x4, offset = 0x4, fixed_abs, tag = 'smem constant byte address 0x4 - core index']
  #allocation1 [shape = 'u32[144,128]{1,0:T(1,128)}', space=vmem, size = 0x12000, scoped, tag = 'internal scratch']
  %s0 = inlined_call_operand.vmem [shape: f32[8,32], index: 0, kind: input, shape index: {}]
  %s1 = inlined_call_operand.hbm [shape: f32[1,32], index: 1, kind: input, shape index: {}]
  %s2 = inlined_call_operand.hbm [shape: f32[1,32], index: 2, kind: input, shape index: {}]
  %s3 = inlined_call_operand.vmem [shape: f32[8,32], index: 3, kind: input, shape index: {}]
  %s4 = inlined_call_operand.vmem [shape: f32[8,1], index: 4, kind: input, shape index: {}]
  %s5 = inlined_call_operand.hbm [shape: f32[8,8], index: 5, kind: output, shape index: {}]
  %s6 = sld [smem:[#allocation0]]
  $region38: #{tpu_custom_call.1} parent=0
    _
  %s8 = ssub.s32 1, %s6
  %s9 = scalar_select 0, %s8, %s6
  $region1: #{tpu_custom_call.1} parent=0
    #allocation2 [shape = 'u8[512]{0}', space=vmem, size = 0x400, scoped, tag = 'input window, operand 1, single buffered']
    #allocation3 [shape = 's32[1]{0}', space=sflag, size = 0x4, scoped, tag = 'scoped memory for tpu_custom_call.1']
    #allocation4 [shape = 's32[1]{0}', space=sflag, size = 0x4, scoped, tag = 'scoped memory for tpu_custom_call.1']
    #allocation5 [shape = 'u8[512]{0}', space=vmem, size = 0x400, scoped, tag = 'input window, operand 2, single buffered']
    #allocation6 [shape = 's32[1]{0}', space=sflag, size = 0x4, scoped, tag = 'scoped memory for tpu_custom_call.1']
    #allocation7 [shape = 'u8[4096]{0}', space=vmem, size = 0x1000, scoped, tag = 'output window, operand 0, single buffered']
    %10 = vsyncpa [#allocation3], 0
    %11 = vsyncpa [#allocation6], 0
    %12 = vsyncpa [#allocation4], 0
    // Predicated region
    $region2: #{tpu_custom_call.1} parent=1 // pred_check
      _
    $region3: #{tpu_custom_call.1} parent=1 // pred_check_branch
      %14 = sbr.rel (0) target = $region5
    $region4: #{tpu_custom_call.1} parent=1 // pred_region
      _
    $region5: #{tpu_custom_call.1} parent=1 // pred_fallthru
      _
    // Predicated region
    $region6: #{tpu_custom_call.1} parent=1 // pred_check
      _
    $region7: #{tpu_custom_call.1} parent=1 // pred_check_branch
      %16 = sbr.rel (0) target = $region9
    $region8: #{tpu_custom_call.1} parent=1 // pred_region
      %s18 = ssub.s32 16, 16
      %19 = vsyncadd [#allocation3], %s18
      %s21 = sshll.u32 [#allocation2], 4
      %s22 = int_to_ptr.vmem [resolvable:$true] %s21
      %24 = dma.hbm_to_vmem [thread:$0]  %s1, 16, %s22, [#allocation3]
    $region9: #{tpu_custom_call.1} parent=1 // pred_fallthru
      _
    // Predicated region
    $region10: #{tpu_custom_call.1} parent=1 // pred_check
      _
    $region11: #{tpu_custom_call.1} parent=1 // pred_check_branch
      %26 = sbr.rel (0) target = $region13
    $region12: #{tpu_custom_call.1} parent=1 // pred_region
      %s28 = ssub.s32 16, 16
      %29 = vsyncadd [#allocation6], %s28
      %s31 = sshll.u32 [#allocation5], 4
      %s32 = int_to_ptr.vmem [resolvable:$true] %s31
      %34 = dma.hbm_to_vmem [thread:$0]  %s2, 16, %s32, [#allocation6]
    $region13: #{tpu_custom_call.1} parent=1 // pred_fallthru
      _
    // Predicated region
    $region14: #{tpu_custom_call.1} parent=1 // pred_check
      _
    $region15: #{tpu_custom_call.1} parent=1 // pred_check_branch
      %36 = sbr.rel (0) target = $region17
    $region16: #{tpu_custom_call.1} parent=1 // pred_region
      _
    $region17: #{tpu_custom_call.1} parent=1 // pred_fallthru
      _
    // Predicated region
    $region18: #{tpu_custom_call.1} parent=1 // pred_check
      _
    $region19: #{tpu_custom_call.1} parent=1 // pred_check_branch
      %38 = sbr.rel (0) target = $region21
    $region20: #{tpu_custom_call.1} parent=1 // pred_region
      _
    $region21: #{tpu_custom_call.1} parent=1 // pred_fallthru
      _
    // Predicated region
    $region22: #{tpu_custom_call.1} parent=1 // pred_check
      _
    $region23: #{tpu_custom_call.1} parent=1 // pred_check_branch
      %40 = sbr.rel (0) target = $region25
    $region24: #{tpu_custom_call.1} parent=1 // pred_region
      %41 = dma.done [#allocation3], 16
    $region25: #{tpu_custom_call.1} parent=1 // pred_fallthru
      _
    // Predicated region
    $region26: #{tpu_custom_call.1} parent=1 // pred_check
      _
    $region27: #{tpu_custom_call.1} parent=1 // pred_check_branch
      %43 = sbr.rel (0) target = $region29
    $region28: #{tpu_custom_call.1} parent=1 // pred_region
      %44 = dma.done [#allocation6], 16
    $region29: #{tpu_custom_call.1} parent=1 // pred_fallthru
      _
    %v45 = vld [vmem:[%s0] sm:$0xff]
    %v46 = vld [vmem:[#allocation2] sm:$0x1]
    %v48 = vlaneseq
    %v49 = vshrl.u32 %v48, 7
    %v50 = vsub.s32 0, %v49
    %v51 = vrot.slane %v46, %v50
    %v53 = vsub.f32 %v45, %v51
    %v54 = vld [vmem:[#allocation5] sm:$0x1]
    %v56 = vlaneseq
    %v57 = vshrl.u32 %v56, 7
    %v58 = vsub.s32 0, %v57
    %v59 = vrot.slane %v54, %v58
    %v61 = vmul.f32 %v53, %v59
    %vm62 = vcmp.ne.f32.partialorder %v61, %v61
    %v63 = vsel %vm62, 0.0, %v61
    %v64 = vld [vmem:[%s3] sm:$0xff]
    %v65 = vld [vmem:[%s4] sm:$0xff]
    %67 = vset.pattern.permute.xlu0 0
    %68 = vperm.xlu0 %67, %v65
    %v69 = vpop.permute.xlu0 %68
    %vm71 = vcmask 261120
    %v73 = vsel %vm71, %v64, 0
    %v76 = vsel %vm71, %v63, 0
    %78 = vmatprep.subr.mxu0 0.0
    %79 = vmatpush1.xpose.msra.mxu0 %v76
    %80 = vmatprep.subr.mxu0 0.0
    %81 = vmatpush1.xpose.msra.mxu0 0.0
    %82 = vmatprep.subr.mxu0 0.0
    %83 = vmatpush1.xpose.msra.mxu0 0.0
    %84 = vmatprep.subr.mxu0 0.0
    %85 = vmatpush1.xpose.msra.mxu0 0.0
    %86 = vmatprep.subr.mxu0 0.0
    %87 = vmatpush1.xpose.msra.mxu0 0.0
    %88 = vmatprep.subr.mxu0 0.0
    %89 = vmatpush1.xpose.msra.mxu0 0.0
    %90 = vmatprep.subr.mxu0 0.0
    %91 = vmatpush1.xpose.msra.mxu0 0.0
    %92 = vmatprep.subr.mxu0 0.0
    %93 = vmatpush1.xpose.msra.mxu0 0.0
    %94 = vmatprep.subr.mxu0 0.0
    %95 = vmatpush1.xpose.msra.mxu0 0.0
    %96 = vmatprep.subr.mxu0 0.0
    %97 = vmatpush1.xpose.msra.mxu0 0.0
    %98 = vmatprep.subr.mxu0 0.0
    %99 = vmatpush1.xpose.msra.mxu0 0.0
    %100 = vmatprep.subr.mxu0 0.0
    %101 = vmatpush1.xpose.msra.mxu0 0.0
    %102 = vmatprep.subr.mxu0 0.0
    %103 = vmatpush1.xpose.msra.mxu0 0.0
    %104 = vmatprep.subr.mxu0 0.0
    %105 = vmatpush1.xpose.msra.mxu0 0.0
    %106 = vmatprep.subr.mxu0 0.0
    %107 = vmatpush1.xpose.msra.mxu0 0.0
    %108 = vmatprep.subr.mxu0 0.0
    %109 = vmatpush1.xpose.msra.mxu0 0.0
    %110 = vmatprep.subr.mxu0 0.0
    %111 = vmatpush1.xpose.msra.mxu0 0.0
    %112 = vmatprep.subr.mxu0 0.0
    %113 = vmatpush1.xpose.msra.mxu0 0.0
    %114 = vmatprep.subr.mxu0 0.0
    %115 = vmatpush1.xpose.msra.mxu0 0.0
    %116 = vmatprep.subr.mxu0 0.0
    %117 = vmatpush1.xpose.msra.mxu0 0.0
    %118 = vmatprep.subr.mxu0 0.0
    %119 = vmatpush1.xpose.msra.mxu0 0.0
    %120 = vmatprep.subr.mxu0 0.0
    %121 = vmatpush1.xpose.msra.mxu0 0.0
    %122 = vmatprep.subr.mxu0 0.0
    %123 = vmatpush1.xpose.msra.mxu0 0.0
    %124 = vmatprep.subr.mxu0 0.0
    %125 = vmatpush1.xpose.msra.mxu0 0.0
    %126 = vmatprep.subr.mxu0 0.0
    %127 = vmatpush1.xpose.msra.mxu0 0.0
    %128 = vmatprep.subr.mxu0 0.0
    %129 = vmatpush1.xpose.msra.mxu0 0.0
    %130 = vmatprep.subr.mxu0 0.0
    %131 = vmatpush1.xpose.msra.mxu0 0.0
    %132 = vmatprep.subr.mxu0 0.0
    %133 = vmatpush1.xpose.msra.mxu0 0.0
    %134 = vmatprep.subr.mxu0 0.0
    %135 = vmatpush1.xpose.msra.mxu0 0.0
    %136 = vmatprep.subr.mxu0 0.0
    %137 = vmatpush1.xpose.msra.mxu0 0.0
    %138 = vmatprep.subr.mxu0 0.0
    %139 = vmatpush1.xpose.msra.mxu0 0.0
    %140 = vmatprep.subr.mxu0 0.0
    %141 = vmatpush1.xpose.msra.mxu0 0.0
    %142 = vmatprep.mubr.f32.mxu0 0.0
    %143 = vmatmul.mubr.f32.gmra.mrb[0].mxu0 %v73
    %v144 = vpop.f32.mrb[0].mxu0
    %v145 = vadd.f32 %v69, %v144
    %v146 = vpop.f32.mrb[0].mxu0
    %147 = vdwg.mxu0
    %vm148 = vcmask 64512
    %149 = vst.msk [vmem:[#allocation7] sm:$0xff] %vm148, %v145
    // Predicated region
    $region30: #{tpu_custom_call.1} parent=1 // pred_check
      _
    $region31: #{tpu_custom_call.1} parent=1 // pred_check_branch
      %151 = sbr.rel (0) target = $region33
    $region32: #{tpu_custom_call.1} parent=1 // pred_region
      %s153 = ssub.s32 128, 128
      %154 = vsyncadd [#allocation4], %s153
      %s156 = sshll.u32 [#allocation7], 4
      %s157 = int_to_ptr.vmem [resolvable:$true] %s156
      %159 = dma.vmem_to_hbm [thread:$0]  %s157, 128, %s5, [#allocation4]
    $region33: #{tpu_custom_call.1} parent=1 // pred_fallthru
      _
    // Predicated region
    $region34: #{tpu_custom_call.1} parent=1 // pred_check
      _
    $region35: #{tpu_custom_call.1} parent=1 // pred_check_branch
      %161 = sbr.rel (0) target = $region37
    $region36: #{tpu_custom_call.1} parent=1 // pred_region
      %162 = dma.done [#allocation4], 128
    $region37: #{tpu_custom_call.1} parent=1 // pred_fallthru
      _
    %163 = vsyncpa [#allocation3], 1
    %164 = vsyncpa [#allocation6], 1
    %165 = vsyncpa [#allocation4], 1

</llo_original>
